<compile_context>
chip_gen: v7x
topology: tpu7x:2x2x1
jax: 0.10.0
libtpu: 0.0.40
codegen_flags: <defaults>
</compile_context>

<pallas_src>
import functools

import jax
import jax.numpy as jnp
from jax.experimental import pallas as pl
from jax.experimental.pallas import tpu as pltpu


def _round_up(x, m):
    return (x + m - 1) // m * m


def _pick_tile(dim, preferred, align=128):
    """Largest multiple of `align` that is <= min(preferred, dim) and divides dim."""
    assert dim % align == 0, (dim, align)
    t = max(align, (min(preferred, dim) // align) * align)
    while dim % t:
        t -= align
    return t


# ---------------------------------------------------------------------------
# Fused single-kernel path (small graphs: everything resident in VMEM).
# ---------------------------------------------------------------------------
def _fused_chain_kernel(use_degree, has_bias, *refs):
    it = iter(refs)
    adj_ref = next(it)
    x_ref = next(it)
    w_ref = next(it)
    deg_ref = next(it) if use_degree else None
    bias_ref = next(it) if has_bias else None
    o_ref = next(it)
    t_ref = next(it)  # (Np, Fp) bf16 VMEM scratch for the chained intermediates

    # t = x @ W   (f32 accumulate; stored bf16 so the next MXU pass stays bf16)
    t = jnp.dot(x_ref[...], w_ref[...], preferred_element_type=jnp.float32)
    t_ref[...] = t.astype(t_ref.dtype)

    # t = adj @ t
    t = jnp.dot(adj_ref[...], t_ref[...], preferred_element_type=jnp.float32)
    if use_degree:
        t_ref[...] = t.astype(t_ref.dtype)
        # t = adj @ t
        t = jnp.dot(adj_ref[...], t_ref[...], preferred_element_type=jnp.float32)
        t_ref[...] = t.astype(t_ref.dtype)
        # t = sqrt(degree) @ t   (sqrt pre-applied in the f32->bf16 cast outside)
        t = jnp.dot(deg_ref[...], t_ref[...], preferred_element_type=jnp.float32)

    if has_bias:
        t = t + bias_ref[0, 0]  # scalar (1-element) bias broadcast
    o_ref[...] = t.astype(o_ref.dtype)


def _fused_chain(adj_c, x_c, w_c, deg_c, bias, out_dtype):
    Np = adj_c.shape[0]
    Fp = w_c.shape[1]
    use_degree = deg_c is not None
    has_bias = bias is not None

    inputs = [adj_c, x_c, w_c]
    if use_degree:
        inputs.append(deg_c)
    in_specs = [pl.BlockSpec(memory_space=pltpu.MemorySpace.VMEM)] * len(inputs)
    if has_bias:
        inputs.append(jnp.reshape(bias, (1, 1)).astype(jnp.float32))
        in_specs.append(pl.BlockSpec(memory_space=pltpu.MemorySpace.SMEM))

    n_nn = 3 if use_degree else 1  # number of (Np x Np) @ (Np x Fp) matmuls
    cost = pl.CostEstimate(
        flops=int(2 * Np * x_c.shape[1] * Fp + n_nn * 2 * Np * Np * Fp),
        transcendentals=0,
        bytes_accessed=int(sum(v.size * v.dtype.itemsize for v in inputs)
                           + Np * Fp * jnp.dtype(out_dtype).itemsize),
    )

    return pl.pallas_call(
        functools.partial(_fused_chain_kernel, use_degree, has_bias),
        out_shape=jax.ShapeDtypeStruct((Np, Fp), out_dtype),
        in_specs=in_specs,
        out_specs=pl.BlockSpec(memory_space=pltpu.MemorySpace.VMEM),
        scratch_shapes=[pltpu.VMEM((Np, Fp), x_c.dtype)],
        compiler_params=pltpu.CompilerParams(vmem_limit_bytes=32 * 1024 * 1024),
        cost_estimate=cost,
    )(*inputs)


# ---------------------------------------------------------------------------
# Tiled fallback path (large graphs).
# ---------------------------------------------------------------------------
def _matmul_kernel(has_bias, acc_in_out, *refs):
    # ref order: a, b, [bias], out, [acc_scratch]
    if acc_in_out:
        if has_bias:
            a_ref, b_ref, bias_ref, o_ref = refs
        else:
            a_ref, b_ref, o_ref = refs
        acc_ref = o_ref  # f32 output: accumulate straight into the resident block
    else:
        if has_bias:
            a_ref, b_ref, bias_ref, o_ref, acc_ref = refs
        else:
            a_ref, b_ref, o_ref, acc_ref = refs

    k = pl.program_id(2)

    @pl.when(k == 0)
    def _():
        acc_ref[...] = jnp.zeros_like(acc_ref)

    acc_ref[...] += jnp.dot(a_ref[...], b_ref[...],
                            preferred_element_type=jnp.float32)

    if has_bias or not acc_in_out:
        @pl.when(k == pl.num_programs(2) - 1)
        def _():
            out = acc_ref[...]
            if has_bias:
                out = out + bias_ref[0, 0]
            o_ref[...] = out.astype(o_ref.dtype)


def pallas_matmul(a, b, *, bias=None, out_dtype=jnp.float32,
                  tm=1024, tn=512, tk=1024):
    """Tiled MXU matmul: out = a @ b [+ scalar bias], f32 accumulation."""
    M, K = a.shape
    Kb, N = b.shape
    assert K == Kb
    # Caller pre-pads so every dim is 128-aligned (lane-dense, full MXU tiles).
    assert M % 128 == 0 and K % 128 == 0 and N % 128 == 0

    tm = _pick_tile(M, tm, 128)
    # v7x megacore: with Fp usually being a single j-tile, all "parallel" work
    # comes from the i axis — make sure there are at least 2 i-tiles.
    if M // tm < 2 and M >= 256:
        tm = _pick_tile(M, M // 2, 128)
    tn = _pick_tile(N, tn, 128)
    tk = _pick_tile(K, tk, 128)
    grid = (M // tm, N // tn, K // tk)

    has_bias = bias is not None
    acc_in_out = jnp.dtype(out_dtype) == jnp.dtype(jnp.float32)

    inputs = [a, b]
    in_specs = [
        pl.BlockSpec((tm, tk), lambda i, j, k: (i, k)),
        pl.BlockSpec((tk, tn), lambda i, j, k: (k, j)),
    ]
    if has_bias:
        inputs.append(jnp.reshape(bias, (1, 1)).astype(jnp.float32))
        in_specs.append(pl.BlockSpec((1, 1), lambda i, j, k: (0, 0),
                                     memory_space=pltpu.MemorySpace.SMEM))

    scratch_shapes = [] if acc_in_out else [pltpu.VMEM((tm, tn), jnp.float32)]

    cost = pl.CostEstimate(
        flops=int(2 * M * N * K),
        transcendentals=0,
        bytes_accessed=int(a.size * a.dtype.itemsize
                           + b.size * b.dtype.itemsize
                           + M * N * jnp.dtype(out_dtype).itemsize),
    )

    return pl.pallas_call(
        functools.partial(_matmul_kernel, has_bias, acc_in_out),
        out_shape=jax.ShapeDtypeStruct((M, N), out_dtype),
        grid_spec=pltpu.PrefetchScalarGridSpec(
            num_scalar_prefetch=0,
            grid=grid,
            in_specs=in_specs,
            out_specs=pl.BlockSpec((tm, tn), lambda i, j, k: (i, j)),
            scratch_shapes=scratch_shapes,
        ),
        compiler_params=pltpu.CompilerParams(
            dimension_semantics=("parallel", "parallel", "arbitrary"),
            vmem_limit_bytes=32 * 1024 * 1024,
        ),
        cost_estimate=cost,
    )(*inputs)


# ---------------------------------------------------------------------------
# Module forward.
# ---------------------------------------------------------------------------
def graph_layer_forward(adj, x, degree, weight, bias=None, *,
                        use_degree=True, force_tiled=False):
    """Pallas implementation of Graph_layer.forward (right-associated chain)."""
    N = adj.shape[0]
    infea, outfea = weight.shape
    out_dtype = jnp.promote_types(x.dtype, weight.dtype)
    compute = jnp.bfloat16  # MXU operand dtype; all accumulation stays f32

    Kp = _round_up(infea, 128)
    Fp = _round_up(outfea, 128)

    # ---- fused single-kernel path (N x N operands fit comfortably in VMEM)
    Np_f = _round_up(N, 128)
    nn_bytes = (2 if use_degree else 1) * Np_f * Np_f * jnp.dtype(compute).itemsize
    if not force_tiled and nn_bytes <= 4 * 1024 * 1024:
        Np = Np_f
        adj_c = jnp.pad(adj, ((0, Np - N), (0, Np - N))).astype(compute)
        x_c = jnp.pad(x, ((0, Np - N), (0, Kp - infea))).astype(compute)
        w_c = jnp.pad(weight, ((0, Kp - infea), (0, Fp - outfea))).astype(compute)
        deg_c = None
        if use_degree:
            # sqrt rides the mandatory f32->bf16 cast: zero extra HBM passes.
            deg_c = jnp.pad(jnp.sqrt(degree.astype(jnp.float32)),
                            ((0, Np - N), (0, Np - N))).astype(compute)
        out = _fused_chain(adj_c, x_c, w_c, deg_c, bias, out_dtype)
        return out[:N, :outfea]

    # ---- tiled multi-kernel path (large graphs)
    # Np padded to a multiple of 256 so tiles stay 128-aligned and the i axis
    # always provides >= 2 tiles. Zero padding is exact (sliced off at the end).
    Np = _round_up(N, 256)
    adj_c = jnp.pad(adj, ((0, Np - N), (0, Np - N))).astype(compute)
    x_c = jnp.pad(x, ((0, Np - N), (0, Kp - infea))).astype(compute)
    w_c = jnp.pad(weight, ((0, Kp - infea), (0, Fp - outfea))).astype(compute)

    # x @ W is negligible compute -> plain XLA dot (no extra kernel launch).
    t = jnp.dot(x_c, w_c, preferred_element_type=jnp.float32).astype(compute)

    if use_degree:
        t = pallas_matmul(adj_c, t, out_dtype=compute)       # adj @ (xW)
        t = pallas_matmul(adj_c, t, out_dtype=compute)       # adj @ adj @ (xW)
        deg_c = jnp.pad(jnp.sqrt(degree.astype(jnp.float32)),
                        ((0, Np - N), (0, Np - N))).astype(compute)
        out = pallas_matmul(deg_c, t, bias=bias, out_dtype=out_dtype)
    else:
        out = pallas_matmul(adj_c, t, bias=bias, out_dtype=out_dtype)

    return out[:N, :outfea]


if __name__ == "__main__":
    # Module config: infea=32, outfea=16, bias=None, use_degree=True
    N, infea, outfea = 64, 32, 16

    key = jax.random.PRNGKey(0)
    k_adj, k_x, k_deg, k_w = jax.random.split(key, 4)

    adj = jax.random.uniform(k_adj, (N, N), dtype=jnp.float32)
    x = jax.random.uniform(k_x, (N, infea), dtype=jnp.float32)
    degree = jax.random.uniform(k_deg, (N, N), dtype=jnp.float32)
    # nn.Parameter(torch.rand(infea, outfea)) -> deterministic uniform init
    weight = jax.random.uniform(k_w, (infea, outfea), dtype=jnp.float32)

    # Pure-JAX references (PyTorch left-to-right order). Our chain is
    # right-associated and uses bf16 MXU operands with f32 accumulation, so a
    # relaxed relative tolerance is expected.
    ref_deg = (degree ** 0.5) @ adj @ adj @ x @ weight
    ref_plain = adj @ x @ weight

    def rel_err(a, b):
        return jnp.max(jnp.abs(a - b)) / (jnp.max(jnp.abs(b)) + 1e-6)

    # 1) Fused single-kernel path (small graph), use_degree=True, bias=None.
    out1 = jax.block_until_ready(
        graph_layer_forward(adj, x, degree, weight, None, use_degree=True))
    assert out1.shape == (N, outfea)
    assert rel_err(out1, ref_deg) < 3e-2, float(rel_err(out1, ref_deg))

    # 2) Tiled multi-kernel path (forced), same semantics.
    out2 = jax.block_until_ready(
        graph_layer_forward(adj, x, degree, weight, None, use_degree=True,
                            force_tiled=True))
    assert rel_err(out2, ref_deg) < 3e-2, float(rel_err(out2, ref_deg))

    # 3) use_degree=False with a truthy 1-element bias.
    bias = jnp.array([0.25], dtype=jnp.float32)
    out3 = jax.block_until_ready(
        graph_layer_forward(adj, x, degree, weight, bias, use_degree=False))
    ref3 = ref_plain + bias[0]
    assert rel_err(out3, ref3) < 3e-2, float(rel_err(out3, ref3))

    print("KERNEL_OK")
</pallas_src>

<mosaic_0001>
module attributes {stable_mosaic.version = 11 : i64} {
  func.func @_fused_chain_kernel(%arg0: memref<128x128xbf16, #tpu.memory_space<vmem>>, %arg1: memref<128x128xbf16, #tpu.memory_space<vmem>>, %arg2: memref<128x128xbf16, #tpu.memory_space<vmem>>, %arg3: memref<128x128xbf16, #tpu.memory_space<vmem>>, %arg4: memref<128x128xf32, #tpu.memory_space<vmem>>, %arg5: memref<128x128xbf16, #tpu.memory_space<vmem>>) attributes {dimension_semantics = [], scalar_prefetch = 0 : i64, scratch_operands = 1 : i64, tpu.core_type = #tpu.core_type<tc>} {
    %c0 = arith.constant 0 : index
    %c0_0 = arith.constant 0 : index
    %0 = vector.load %arg1[%c0, %c0_0] : memref<128x128xbf16, #tpu.memory_space<vmem>>, vector<128x128xbf16>
    %c0_1 = arith.constant 0 : index
    %c0_2 = arith.constant 0 : index
    %1 = vector.load %arg2[%c0_1, %c0_2] : memref<128x128xbf16, #tpu.memory_space<vmem>>, vector<128x128xbf16>
    %cst = arith.constant dense<0.000000e+00> : vector<128x128xf32>
    %2 = tpu.matmul %0, %1, %cst {dimension_numbers = #tpu.dot_dimension_numbers<[1], [0], [0], [1], [0, 0, 1, 1], [], []>} : vector<128x128xbf16>, vector<128x128xbf16>, vector<128x128xf32> -> vector<128x128xf32>
    %3 = arith.truncf %2 : vector<128x128xf32> to vector<128x128xbf16>
    %c0_3 = arith.constant 0 : index
    %c0_4 = arith.constant 0 : index
    %4 = vector.load %arg5[%c0_3, %c0_4] : memref<128x128xbf16, #tpu.memory_space<vmem>>, vector<128x128xbf16>
    tpu.vector_store %arg5[%c0_3, %c0_4], %3 {strides = array<i32>} : memref<128x128xbf16, #tpu.memory_space<vmem>>, vector<128x128xbf16>,
    %c0_5 = arith.constant 0 : index
    %c0_6 = arith.constant 0 : index
    %5 = vector.load %arg0[%c0_5, %c0_6] : memref<128x128xbf16, #tpu.memory_space<vmem>>, vector<128x128xbf16>
    %c0_7 = arith.constant 0 : index
    %c0_8 = arith.constant 0 : index
    %6 = vector.load %arg5[%c0_7, %c0_8] : memref<128x128xbf16, #tpu.memory_space<vmem>>, vector<128x128xbf16>
    %cst_9 = arith.constant dense<0.000000e+00> : vector<128x128xf32>
    %7 = tpu.matmul %5, %6, %cst_9 {dimension_numbers = #tpu.dot_dimension_numbers<[1], [0], [0], [1], [0, 0, 1, 1], [], []>} : vector<128x128xbf16>, vector<128x128xbf16>, vector<128x128xf32> -> vector<128x128xf32>
    %8 = arith.truncf %7 : vector<128x128xf32> to vector<128x128xbf16>
    %c0_10 = arith.constant 0 : index
    %c0_11 = arith.constant 0 : index
    %9 = vector.load %arg5[%c0_10, %c0_11] : memref<128x128xbf16, #tpu.memory_space<vmem>>, vector<128x128xbf16>
    tpu.vector_store %arg5[%c0_10, %c0_11], %8 {strides = array<i32>} : memref<128x128xbf16, #tpu.memory_space<vmem>>, vector<128x128xbf16>,
    %c0_12 = arith.constant 0 : index
    %c0_13 = arith.constant 0 : index
    %10 = vector.load %arg0[%c0_12, %c0_13] : memref<128x128xbf16, #tpu.memory_space<vmem>>, vector<128x128xbf16>
    %c0_14 = arith.constant 0 : index
    %c0_15 = arith.constant 0 : index
    %11 = vector.load %arg5[%c0_14, %c0_15] : memref<128x128xbf16, #tpu.memory_space<vmem>>, vector<128x128xbf16>
    %cst_16 = arith.constant dense<0.000000e+00> : vector<128x128xf32>
    %12 = tpu.matmul %10, %11, %cst_16 {dimension_numbers = #tpu.dot_dimension_numbers<[1], [0], [0], [1], [0, 0, 1, 1], [], []>} : vector<128x128xbf16>, vector<128x128xbf16>, vector<128x128xf32> -> vector<128x128xf32>
    %13 = arith.truncf %12 : vector<128x128xf32> to vector<128x128xbf16>
    %c0_17 = arith.constant 0 : index
    %c0_18 = arith.constant 0 : index
    %14 = vector.load %arg5[%c0_17, %c0_18] : memref<128x128xbf16, #tpu.memory_space<vmem>>, vector<128x128xbf16>
    tpu.vector_store %arg5[%c0_17, %c0_18], %13 {strides = array<i32>} : memref<128x128xbf16, #tpu.memory_space<vmem>>, vector<128x128xbf16>,
    %c0_19 = arith.constant 0 : index
    %c0_20 = arith.constant 0 : index
    %15 = vector.load %arg3[%c0_19, %c0_20] : memref<128x128xbf16, #tpu.memory_space<vmem>>, vector<128x128xbf16>
    %c0_21 = arith.constant 0 : index
    %c0_22 = arith.constant 0 : index
    %16 = vector.load %arg5[%c0_21, %c0_22] : memref<128x128xbf16, #tpu.memory_space<vmem>>, vector<128x128xbf16>
    %cst_23 = arith.constant dense<0.000000e+00> : vector<128x128xf32>
    %17 = tpu.matmul %15, %16, %cst_23 {dimension_numbers = #tpu.dot_dimension_numbers<[1], [0], [0], [1], [0, 0, 1, 1], [], []>} : vector<128x128xbf16>, vector<128x128xbf16>, vector<128x128xf32> -> vector<128x128xf32>
    %c0_24 = arith.constant 0 : index
    %c0_25 = arith.constant 0 : index
    %18 = vector.load %arg4[%c0_24, %c0_25] : memref<128x128xf32, #tpu.memory_space<vmem>>, vector<128x128xf32>
    tpu.vector_store %arg4[%c0_24, %c0_25], %17 {strides = array<i32>} : memref<128x128xf32, #tpu.memory_space<vmem>>, vector<128x128xf32>,
    return
  }
}

</mosaic_0001>

<llo_original>
// kernel: tpu_custom_call.1
$region0: #{tpu_custom_call.1}
  #allocation0 [shape = 'u32[]', space=smem, size = 0x4, offset = 0x4, fixed_abs, tag = 'smem constant byte address 0x4 - core index']
  #allocation1 [shape = 'u32[144,128]{1,0:T(1,128)}', space=vmem, size = 0x12000, scoped, tag = 'internal scratch']
  #allocation2 [shape = 'bf16[128,128]{1,0:T(16,128)(2,1)}', space=vmem, size = 0x8000, scoped, tag = 'scratch operand']
  %s0 = inlined_call_operand.hbm [shape: bf16[128,128], index: 0, kind: input, shape index: {}]
  %s1 = inlined_call_operand.hbm [shape: bf16[128,128], index: 1, kind: input, shape index: {}]
  %s2 = inlined_call_operand.hbm [shape: bf16[128,128], index: 2, kind: input, shape index: {}]
  %s3 = inlined_call_operand.hbm [shape: bf16[128,128], index: 3, kind: input, shape index: {}]
  %s4 = inlined_call_operand.hbm [shape: f32[128,128], index: 4, kind: output, shape index: {}]
  %s5 = sld [smem:[#allocation0]]
  $region42: #{tpu_custom_call.1} parent=0
    _
  %s7 = ssub.s32 1, %s5
  %s8 = scalar_select 0, %s7, %s5
  $region1: #{tpu_custom_call.1} parent=0
    #allocation3 [shape = 'u8[32768]{0}', space=vmem, size = 0x8000, scoped, tag = 'input window, operand 0, single buffered']
    #allocation4 [shape = 's32[1]{0}', space=sflag, size = 0x4, scoped, tag = 'scoped memory for tpu_custom_call.1']
    #allocation5 [shape = 's32[1]{0}', space=sflag, size = 0x4, scoped, tag = 'scoped memory for tpu_custom_call.1']
    #allocation6 [shape = 'u8[32768]{0}', space=vmem, size = 0x8000, scoped, tag = 'input window, operand 1, single buffered']
    #allocation7 [shape = 's32[1]{0}', space=sflag, size = 0x4, scoped, tag = 'scoped memory for tpu_custom_call.1']
    #allocation8 [shape = 'u8[32768]{0}', space=vmem, size = 0x8000, scoped, tag = 'input window, operand 2, single buffered']
    #allocation9 [shape = 'u8[32768]{0}', space=vmem, size = 0x8000, scoped, tag = 'input window, operand 3, single buffered']
    #allocation10 [shape = 's32[1]{0}', space=sflag, size = 0x4, scoped, tag = 'scoped memory for tpu_custom_call.1']
    #allocation11 [shape = 'u8[65536]{0}', space=vmem, size = 0x10000, scoped, tag = 'output window, operand 0, single buffered']
    %9 = vsyncpa [#allocation4], 0
    %10 = vsyncpa [#allocation7], 0
    %11 = vsyncpa [#allocation10], 0
    %12 = vsyncpa [#allocation5], 0
    // Predicated region
    $region2: #{tpu_custom_call.1} parent=1 // pred_check
      _
    $region3: #{tpu_custom_call.1} parent=1 // pred_check_branch
      %14 = sbr.rel (0) target = $region5
    $region4: #{tpu_custom_call.1} parent=1 // pred_region
      %s16 = ssub.s32 1024, 1024
      %17 = vsyncadd [#allocation4], %s16
      %s18 = sshll.u32 [#allocation3], 4
      %s19 = int_to_ptr.vmem [resolvable:$true] %s18
      %24 = dma.hbm_to_vmem [thread:$0]  %s0, 1024, %s19, [#allocation4], 64, 64, 4
    $region5: #{tpu_custom_call.1} parent=1 // pred_fallthru
      _
    // Predicated region
    $region6: #{tpu_custom_call.1} parent=1 // pred_check
      _
    $region7: #{tpu_custom_call.1} parent=1 // pred_check_branch
      %26 = sbr.rel (0) target = $region9
    $region8: #{tpu_custom_call.1} parent=1 // pred_region
      %s28 = ssub.s32 1024, 1024
      %29 = vsyncadd [#allocation7], %s28
      %s30 = sshll.u32 [#allocation6], 4
      %s31 = int_to_ptr.vmem [resolvable:$true] %s30
      %36 = dma.hbm_to_vmem [thread:$0]  %s1, 1024, %s31, [#allocation7], 64, 64, 4
    $region9: #{tpu_custom_call.1} parent=1 // pred_fallthru
      _
    // Predicated region
    $region10: #{tpu_custom_call.1} parent=1 // pred_check
      _
    $region11: #{tpu_custom_call.1} parent=1 // pred_check_branch
      %38 = sbr.rel (0) target = $region13
    $region12: #{tpu_custom_call.1} parent=1 // pred_region
      %s40 = ssub.s32 1024, 1024
      %41 = vsyncadd [#allocation7], %s40
      %s42 = sshll.u32 [#allocation8], 4
      %s43 = int_to_ptr.vmem [resolvable:$true] %s42
      %48 = dma.hbm_to_vmem [thread:$0]  %s2, 1024, %s43, [#allocation7], 64, 64, 4
    $region13: #{tpu_custom_call.1} parent=1 // pred_fallthru
      _
    // Predicated region
    $region14: #{tpu_custom_call.1} parent=1 // pred_check
      _
    $region15: #{tpu_custom_call.1} parent=1 // pred_check_branch
      %50 = sbr.rel (0) target = $region17
    $region16: #{tpu_custom_call.1} parent=1 // pred_region
      %s52 = ssub.s32 1024, 1024
      %53 = vsyncadd [#allocation10], %s52
      %s54 = sshll.u32 [#allocation9], 4
      %s55 = int_to_ptr.vmem [resolvable:$true] %s54
      %60 = dma.hbm_to_vmem [thread:$0]  %s3, 1024, %s55, [#allocation10], 64, 64, 4
    $region17: #{tpu_custom_call.1} parent=1 // pred_fallthru
      _
    // Predicated region
    $region18: #{tpu_custom_call.1} parent=1 // pred_check
      _
    $region19: #{tpu_custom_call.1} parent=1 // pred_check_branch
      %62 = sbr.rel (0) target = $region21
    $region20: #{tpu_custom_call.1} parent=1 // pred_region
      %63 = dma.done [#allocation4], 1024
    $region21: #{tpu_custom_call.1} parent=1 // pred_fallthru
      _
    // Predicated region
    $region22: #{tpu_custom_call.1} parent=1 // pred_check
      _
    $region23: #{tpu_custom_call.1} parent=1 // pred_check_branch
      %65 = sbr.rel (0) target = $region25
    $region24: #{tpu_custom_call.1} parent=1 // pred_region
      %66 = dma.done [#allocation7], 1024
    $region25: #{tpu_custom_call.1} parent=1 // pred_fallthru
      _
    // Predicated region
    $region26: #{tpu_custom_call.1} parent=1 // pred_check
      _
    $region27: #{tpu_custom_call.1} parent=1 // pred_check_branch
      %68 = sbr.rel (0) target = $region29
    $region28: #{tpu_custom_call.1} parent=1 // pred_region
      %69 = dma.done [#allocation7], 1024
    $region29: #{tpu_custom_call.1} parent=1 // pred_fallthru
      _
    // Predicated region
    $region30: #{tpu_custom_call.1} parent=1 // pred_check
      _
    $region31: #{tpu_custom_call.1} parent=1 // pred_check_branch
      %71 = sbr.rel (0) target = $region33
    $region32: #{tpu_custom_call.1} parent=1 // pred_region
      %72 = dma.done [#allocation10], 1024
    $region33: #{tpu_custom_call.1} parent=1 // pred_fallthru
      _
    %v74 = vld [vmem:[#allocation6] sm:$0xf]
    %v75 = vld [vmem:[#allocation6 + $0x4] sm:$0xf]
    %v76 = vld [vmem:[#allocation6 + $0x8] sm:$0xf]
    %v77 = vld [vmem:[#allocation6 + $0xc] sm:$0xf]
    %v78 = vld [vmem:[#allocation6 + $0x10] sm:$0xf]
    %v79 = vld [vmem:[#allocation6 + $0x14] sm:$0xf]
    %v80 = vld [vmem:[#allocation6 + $0x18] sm:$0xf]
    %v81 = vld [vmem:[#allocation6 + $0x1c] sm:$0xf]
    %v82 = vld [vmem:[#allocation6 + $0x20] sm:$0xf]
    %v83 = vld [vmem:[#allocation6 + $0x24] sm:$0xf]
    %v84 = vld [vmem:[#allocation6 + $0x28] sm:$0xf]
    %v85 = vld [vmem:[#allocation6 + $0x2c] sm:$0xf]
    %v86 = vld [vmem:[#allocation6 + $0x30] sm:$0xf]
    %v87 = vld [vmem:[#allocation6 + $0x34] sm:$0xf]
    %v88 = vld [vmem:[#allocation6 + $0x38] sm:$0xf]
    %v89 = vld [vmem:[#allocation6 + $0x3c] sm:$0xf]
    %v90 = vld [vmem:[#allocation8] sm:$0xf]
    %v91 = vld [vmem:[#allocation8 + $0x4] sm:$0xf]
    %v92 = vld [vmem:[#allocation8 + $0x8] sm:$0xf]
    %v93 = vld [vmem:[#allocation8 + $0xc] sm:$0xf]
    %v94 = vld [vmem:[#allocation8 + $0x10] sm:$0xf]
    %v95 = vld [vmem:[#allocation8 + $0x14] sm:$0xf]
    %v96 = vld [vmem:[#allocation8 + $0x18] sm:$0xf]
    %v97 = vld [vmem:[#allocation8 + $0x1c] sm:$0xf]
    %v98 = vld [vmem:[#allocation8 + $0x20] sm:$0xf]
    %v99 = vld [vmem:[#allocation8 + $0x24] sm:$0xf]
    %v100 = vld [vmem:[#allocation8 + $0x28] sm:$0xf]
    %v101 = vld [vmem:[#allocation8 + $0x2c] sm:$0xf]
    %v102 = vld [vmem:[#allocation8 + $0x30] sm:$0xf]
    %v103 = vld [vmem:[#allocation8 + $0x34] sm:$0xf]
    %v104 = vld [vmem:[#allocation8 + $0x38] sm:$0xf]
    %v105 = vld [vmem:[#allocation8 + $0x3c] sm:$0xf]
    %v122 = vunpack.c.l.b16 %v74
    %v123 = vunpack.c.l.b16 %v75
    %v124 = vunpack.c.l.b16 %v76
    %v125 = vunpack.c.l.b16 %v77
    %v126 = vunpack.c.l.b16 %v78
    %v127 = vunpack.c.l.b16 %v79
    %v128 = vunpack.c.l.b16 %v80
    %v129 = vunpack.c.l.b16 %v81
    %v130 = vunpack.c.l.b16 %v82
    %v131 = vunpack.c.l.b16 %v83
    %v132 = vunpack.c.l.b16 %v84
    %v133 = vunpack.c.l.b16 %v85
    %v134 = vunpack.c.l.b16 %v86
    %v135 = vunpack.c.l.b16 %v87
    %v136 = vunpack.c.l.b16 %v88
    %v137 = vunpack.c.l.b16 %v89
    %v138 = vpack.c.b16 %v123, %v122
    %v139 = vpack.c.b16 %v125, %v124
    %v140 = vpack.c.b16 %v127, %v126
    %v141 = vpack.c.b16 %v129, %v128
    %v142 = vpack.c.b16 %v131, %v130
    %v143 = vpack.c.b16 %v133, %v132
    %v144 = vpack.c.b16 %v135, %v134
    %v145 = vpack.c.b16 %v137, %v136
    %v170 = vunpack.c.l.b16 %v90
    %v171 = vunpack.c.l.b16 %v91
    %v172 = vunpack.c.l.b16 %v92
    %v173 = vunpack.c.l.b16 %v93
    %v174 = vunpack.c.l.b16 %v94
    %v175 = vunpack.c.l.b16 %v95
    %v176 = vunpack.c.l.b16 %v96
    %v177 = vunpack.c.l.b16 %v97
    %v178 = vunpack.c.l.b16 %v98
    %v179 = vunpack.c.l.b16 %v99
    %v180 = vunpack.c.l.b16 %v100
    %v181 = vunpack.c.l.b16 %v101
    %v182 = vunpack.c.l.b16 %v102
    %v183 = vunpack.c.l.b16 %v103
    %v184 = vunpack.c.l.b16 %v104
    %v185 = vunpack.c.l.b16 %v105
    %v186 = vpack.c.b16 %v171, %v170
    %v187 = vpack.c.b16 %v173, %v172
    %v188 = vpack.c.b16 %v175, %v174
    %v189 = vpack.c.b16 %v177, %v176
    %v190 = vpack.c.b16 %v179, %v178
    %v191 = vpack.c.b16 %v181, %v180
    %v192 = vpack.c.b16 %v183, %v182
    %v193 = vpack.c.b16 %v185, %v184
    %202 = vmatprep.subr.bf16.mxu0 0
    %203 = vmatpush1.bf16.msra.mxu0 %v186
    %204 = vmatprep.subr.bf16.mxu0 0
    %205 = vmatpush1.bf16.msra.mxu0 %v187
    %206 = vmatprep.subr.bf16.mxu0 0
    %207 = vmatpush1.bf16.msra.mxu0 %v188
    %208 = vmatprep.subr.bf16.mxu0 0
    %209 = vmatpush1.bf16.msra.mxu0 %v189
    %210 = vmatprep.subr.bf16.mxu0 0
    %211 = vmatpush1.bf16.msra.mxu0 %v190
    %212 = vmatprep.subr.bf16.mxu0 0
    %213 = vmatpush1.bf16.msra.mxu0 %v191
    %214 = vmatprep.subr.bf16.mxu0 0
    %215 = vmatpush1.bf16.msra.mxu0 %v192
    %216 = vmatprep.subr.bf16.mxu0 0
    %217 = vmatpush1.bf16.msra.mxu0 %v193
    %218 = vmatprep.subr.bf16.mxu0 0
    %219 = vmatpush1.bf16.msra.mxu0 0
    %220 = vmatprep.subr.bf16.mxu0 0
    %221 = vmatpush1.bf16.msra.mxu0 0
    %222 = vmatprep.subr.bf16.mxu0 0
    %223 = vmatpush1.bf16.msra.mxu0 0
    %224 = vmatprep.subr.bf16.mxu0 0
    %225 = vmatpush1.bf16.msra.mxu0 0
    %226 = vmatprep.subr.bf16.mxu0 0
    %227 = vmatpush1.bf16.msra.mxu0 0
    %228 = vmatprep.subr.bf16.mxu0 0
    %229 = vmatpush1.bf16.msra.mxu0 0
    %230 = vmatprep.subr.bf16.mxu0 0
    %231 = vmatpush1.bf16.msra.mxu0 0
    %232 = vmatprep.subr.bf16.mxu0 0
    %233 = vmatpush1.bf16.msra.mxu0 0
    %234 = vmatprep.mubr.bf16.mxu0 0
    %235 = vmatmul.mubr.bf16.gmra.mrb[0].mxu0 %v138
    %v236 = vpop.f32.mrb[0].mxu0
    %v237 = vadd.f32 0.0, %v236
    %v238 = vpop.f32.mrb[0].mxu0
    %v239 = vpop.f32.mrb[0].mxu0
    %v240 = vadd.f32 0.0, %v239
    %v241 = vpop.f32.mrb[0].mxu0
    %242 = vmatprep.mubr.bf16.mxu0 0
    %243 = vmatmul.mubr.bf16.gmra.mrb[0].mxu0 %v139
    %v244 = vpop.f32.mrb[0].mxu0
    %v245 = vadd.f32 0.0, %v244
    %v246 = vpop.f32.mrb[0].mxu0
    %v247 = vpop.f32.mrb[0].mxu0
    %v248 = vadd.f32 0.0, %v247
    %v249 = vpop.f32.mrb[0].mxu0
    %250 = vmatprep.mubr.bf16.mxu0 0
    %251 = vmatmul.mubr.bf16.gmra.mrb[0].mxu0 %v140
    %v252 = vpop.f32.mrb[0].mxu0
    %v253 = vadd.f32 0.0, %v252
    %v254 = vpop.f32.mrb[0].mxu0
    %v255 = vpop.f32.mrb[0].mxu0
    %v256 = vadd.f32 0.0, %v255
    %v257 = vpop.f32.mrb[0].mxu0
    %258 = vmatprep.mubr.bf16.mxu0 0
    %259 = vmatmul.mubr.bf16.gmra.mrb[0].mxu0 %v141
    %v260 = vpop.f32.mrb[0].mxu0
    %v261 = vadd.f32 0.0, %v260
    %v262 = vpop.f32.mrb[0].mxu0
    %v263 = vpop.f32.mrb[0].mxu0
    %v264 = vadd.f32 0.0, %v263
    %v265 = vpop.f32.mrb[0].mxu0
    %266 = vmatprep.mubr.bf16.mxu0 0
    %267 = vmatmul.mubr.bf16.gmra.mrb[0].mxu0 %v142
    %v268 = vpop.f32.mrb[0].mxu0
    %v269 = vadd.f32 0.0, %v268
    %v270 = vpop.f32.mrb[0].mxu0
    %v271 = vpop.f32.mrb[0].mxu0
    %v272 = vadd.f32 0.0, %v271
    %v273 = vpop.f32.mrb[0].mxu0
    %274 = vmatprep.mubr.bf16.mxu0 0
    %275 = vmatmul.mubr.bf16.gmra.mrb[0].mxu0 %v143
    %v276 = vpop.f32.mrb[0].mxu0
    %v277 = vadd.f32 0.0, %v276
    %v278 = vpop.f32.mrb[0].mxu0
    %v279 = vpop.f32.mrb[0].mxu0
    %v280 = vadd.f32 0.0, %v279
    %v281 = vpop.f32.mrb[0].mxu0
    %282 = vmatprep.mubr.bf16.mxu0 0
    %283 = vmatmul.mubr.bf16.gmra.mrb[0].mxu0 %v144
    %v284 = vpop.f32.mrb[0].mxu0
    %v285 = vadd.f32 0.0, %v284
    %v286 = vpop.f32.mrb[0].mxu0
    %v287 = vpop.f32.mrb[0].mxu0
    %v288 = vadd.f32 0.0, %v287
    %v289 = vpop.f32.mrb[0].mxu0
    %290 = vmatprep.mubr.bf16.mxu0 0
    %291 = vmatmul.mubr.bf16.gmra.mrb[0].mxu0 %v145
    %v292 = vpop.f32.mrb[0].mxu0
    %v293 = vadd.f32 0.0, %v292
    %v294 = vpop.f32.mrb[0].mxu0
    %v295 = vpop.f32.mrb[0].mxu0
    %v296 = vadd.f32 0.0, %v295
    %v297 = vpop.f32.mrb[0].mxu0
    %298 = vdwg.mxu0
    %v299 = vpack.c.bf16 %v240, %v237
    %v300 = vpack.c.bf16 %v248, %v245
    %v301 = vpack.c.bf16 %v256, %v253
    %v302 = vpack.c.bf16 %v264, %v261
    %v303 = vpack.c.bf16 %v272, %v269
    %v304 = vpack.c.bf16 %v280, %v277
    %v305 = vpack.c.bf16 %v288, %v285
    %v306 = vpack.c.bf16 %v296, %v293
    %307 = vst [vmem:[#allocation2] sm:$0xff] %v299
    %308 = vst [vmem:[#allocation2 + $0x8] sm:$0xff] %v300
    %309 = vst [vmem:[#allocation2 + $0x10] sm:$0xff] %v301
    %310 = vst [vmem:[#allocation2 + $0x18] sm:$0xff] %v302
    %311 = vst [vmem:[#allocation2 + $0x20] sm:$0xff] %v303
    %312 = vst [vmem:[#allocation2 + $0x28] sm:$0xff] %v304
    %313 = vst [vmem:[#allocation2 + $0x30] sm:$0xff] %v305
    %314 = vst [vmem:[#allocation2 + $0x38] sm:$0xff] %v306
    %v315 = vld [vmem:[#allocation3] sm:$0xf]
    %v316 = vld [vmem:[#allocation3 + $0x4] sm:$0xf]
    %v317 = vld [vmem:[#allocation3 + $0x8] sm:$0xf]
    %v318 = vld [vmem:[#allocation3 + $0xc] sm:$0xf]
    %v319 = vld [vmem:[#allocation3 + $0x10] sm:$0xf]
    %v320 = vld [vmem:[#allocation3 + $0x14] sm:$0xf]
    %v321 = vld [vmem:[#allocation3 + $0x18] sm:$0xf]
    %v322 = vld [vmem:[#allocation3 + $0x1c] sm:$0xf]
    %v323 = vld [vmem:[#allocation3 + $0x20] sm:$0xf]
    %v324 = vld [vmem:[#allocation3 + $0x24] sm:$0xf]
    %v325 = vld [vmem:[#allocation3 + $0x28] sm:$0xf]
    %v326 = vld [vmem:[#allocation3 + $0x2c] sm:$0xf]
    %v327 = vld [vmem:[#allocation3 + $0x30] sm:$0xf]
    %v328 = vld [vmem:[#allocation3 + $0x34] sm:$0xf]
    %v329 = vld [vmem:[#allocation3 + $0x38] sm:$0xf]
    %v330 = vld [vmem:[#allocation3 + $0x3c] sm:$0xf]
    %v331 = vld [vmem:[#allocation2] sm:$0xff]
    %v332 = vld [vmem:[#allocation2 + $0x8] sm:$0xff]
    %v333 = vld [vmem:[#allocation2 + $0x10] sm:$0xff]
    %v334 = vld [vmem:[#allocation2 + $0x18] sm:$0xff]
    %v335 = vld [vmem:[#allocation2 + $0x20] sm:$0xff]
    %v336 = vld [vmem:[#allocation2 + $0x28] sm:$0xff]
    %v337 = vld [vmem:[#allocation2 + $0x30] sm:$0xff]
    %v338 = vld [vmem:[#allocation2 + $0x38] sm:$0xff]
    %v355 = vunpack.c.l.b16 %v315
    %v356 = vunpack.c.l.b16 %v316
    %v357 = vunpack.c.l.b16 %v317
    %v358 = vunpack.c.l.b16 %v318
    %v359 = vunpack.c.l.b16 %v319
    %v360 = vunpack.c.l.b16 %v320
    %v361 = vunpack.c.l.b16 %v321
    %v362 = vunpack.c.l.b16 %v322
    %v363 = vunpack.c.l.b16 %v323
    %v364 = vunpack.c.l.b16 %v324
    %v365 = vunpack.c.l.b16 %v325
    %v366 = vunpack.c.l.b16 %v326
    %v367 = vunpack.c.l.b16 %v327
    %v368 = vunpack.c.l.b16 %v328
    %v369 = vunpack.c.l.b16 %v329
    %v370 = vunpack.c.l.b16 %v330
    %v371 = vpack.c.b16 %v356, %v355
    %v372 = vpack.c.b16 %v358, %v357
    %v373 = vpack.c.b16 %v360, %v359
    %v374 = vpack.c.b16 %v362, %v361
    %v375 = vpack.c.b16 %v364, %v363
    %v376 = vpack.c.b16 %v366, %v365
    %v377 = vpack.c.b16 %v368, %v367
    %v378 = vpack.c.b16 %v370, %v369
    %387 = vmatprep.subr.bf16.mxu0 0
    %388 = vmatpush1.bf16.msra.mxu0 %v331
    %389 = vmatprep.subr.bf16.mxu0 0
    %390 = vmatpush1.bf16.msra.mxu0 %v332
    %391 = vmatprep.subr.bf16.mxu0 0
    %392 = vmatpush1.bf16.msra.mxu0 %v333
    %393 = vmatprep.subr.bf16.mxu0 0
    %394 = vmatpush1.bf16.msra.mxu0 %v334
    %395 = vmatprep.subr.bf16.mxu0 0
    %396 = vmatpush1.bf16.msra.mxu0 %v335
    %397 = vmatprep.subr.bf16.mxu0 0
    %398 = vmatpush1.bf16.msra.mxu0 %v336
    %399 = vmatprep.subr.bf16.mxu0 0
    %400 = vmatpush1.bf16.msra.mxu0 %v337
    %401 = vmatprep.subr.bf16.mxu0 0
    %402 = vmatpush1.bf16.msra.mxu0 %v338
    %403 = vmatprep.subr.bf16.mxu0 0
    %404 = vmatpush1.bf16.msra.mxu0 0
    %405 = vmatprep.subr.bf16.mxu0 0
    %406 = vmatpush1.bf16.msra.mxu0 0
    %407 = vmatprep.subr.bf16.mxu0 0
    %408 = vmatpush1.bf16.msra.mxu0 0
    %409 = vmatprep.subr.bf16.mxu0 0
    %410 = vmatpush1.bf16.msra.mxu0 0
    %411 = vmatprep.subr.bf16.mxu0 0
    %412 = vmatpush1.bf16.msra.mxu0 0
    %413 = vmatprep.subr.bf16.mxu0 0
    %414 = vmatpush1.bf16.msra.mxu0 0
    %415 = vmatprep.subr.bf16.mxu0 0
    %416 = vmatpush1.bf16.msra.mxu0 0
    %417 = vmatprep.subr.bf16.mxu0 0
    %418 = vmatpush1.bf16.msra.mxu0 0
    %419 = vmatprep.mubr.bf16.mxu0 0
    %420 = vmatmul.mubr.bf16.gmra.mrb[0].mxu0 %v371
    %v421 = vpop.f32.mrb[0].mxu0
    %v422 = vadd.f32 0.0, %v421
    %v423 = vpop.f32.mrb[0].mxu0
    %v424 = vpop.f32.mrb[0].mxu0
    %v425 = vadd.f32 0.0, %v424
    %v426 = vpop.f32.mrb[0].mxu0
    %427 = vmatprep.mubr.bf16.mxu0 0
    %428 = vmatmul.mubr.bf16.gmra.mrb[0].mxu0 %v372
    %v429 = vpop.f32.mrb[0].mxu0
    %v430 = vadd.f32 0.0, %v429
    %v431 = vpop.f32.mrb[0].mxu0
    %v432 = vpop.f32.mrb[0].mxu0
    %v433 = vadd.f32 0.0, %v432
    %v434 = vpop.f32.mrb[0].mxu0
    %435 = vmatprep.mubr.bf16.mxu0 0
    %436 = vmatmul.mubr.bf16.gmra.mrb[0].mxu0 %v373
    %v437 = vpop.f32.mrb[0].mxu0
    %v438 = vadd.f32 0.0, %v437
    %v439 = vpop.f32.mrb[0].mxu0
    %v440 = vpop.f32.mrb[0].mxu0
    %v441 = vadd.f32 0.0, %v440
    %v442 = vpop.f32.mrb[0].mxu0
    %443 = vmatprep.mubr.bf16.mxu0 0
    %444 = vmatmul.mubr.bf16.gmra.mrb[0].mxu0 %v374
    %v445 = vpop.f32.mrb[0].mxu0
    %v446 = vadd.f32 0.0, %v445
    %v447 = vpop.f32.mrb[0].mxu0
    %v448 = vpop.f32.mrb[0].mxu0
    %v449 = vadd.f32 0.0, %v448
    %v450 = vpop.f32.mrb[0].mxu0
    %451 = vmatprep.mubr.bf16.mxu0 0
    %452 = vmatmul.mubr.bf16.gmra.mrb[0].mxu0 %v375
    %v453 = vpop.f32.mrb[0].mxu0
    %v454 = vadd.f32 0.0, %v453
    %v455 = vpop.f32.mrb[0].mxu0
    %v456 = vpop.f32.mrb[0].mxu0
    %v457 = vadd.f32 0.0, %v456
    %v458 = vpop.f32.mrb[0].mxu0
    %459 = vmatprep.mubr.bf16.mxu0 0
    %460 = vmatmul.mubr.bf16.gmra.mrb[0].mxu0 %v376
    %v461 = vpop.f32.mrb[0].mxu0
    %v462 = vadd.f32 0.0, %v461
    %v463 = vpop.f32.mrb[0].mxu0
    %v464 = vpop.f32.mrb[0].mxu0
    %v465 = vadd.f32 0.0, %v464
    %v466 = vpop.f32.mrb[0].mxu0
    %467 = vmatprep.mubr.bf16.mxu0 0
    %468 = vmatmul.mubr.bf16.gmra.mrb[0].mxu0 %v377
    %v469 = vpop.f32.mrb[0].mxu0
    %v470 = vadd.f32 0.0, %v469
    %v471 = vpop.f32.mrb[0].mxu0
    %v472 = vpop.f32.mrb[0].mxu0
    %v473 = vadd.f32 0.0, %v472
    %v474 = vpop.f32.mrb[0].mxu0
    %475 = vmatprep.mubr.bf16.mxu0 0
    %476 = vmatmul.mubr.bf16.gmra.mrb[0].mxu0 %v378
    %v477 = vpop.f32.mrb[0].mxu0
    %v478 = vadd.f32 0.0, %v477
    %v479 = vpop.f32.mrb[0].mxu0
    %v480 = vpop.f32.mrb[0].mxu0
    %v481 = vadd.f32 0.0, %v480
    %v482 = vpop.f32.mrb[0].mxu0
    %483 = vdwg.mxu0
    %v484 = vpack.c.bf16 %v425, %v422
    %v485 = vpack.c.bf16 %v433, %v430
    %v486 = vpack.c.bf16 %v441, %v438
    %v487 = vpack.c.bf16 %v449, %v446
    %v488 = vpack.c.bf16 %v457, %v454
    %v489 = vpack.c.bf16 %v465, %v462
    %v490 = vpack.c.bf16 %v473, %v470
    %v491 = vpack.c.bf16 %v481, %v478
    %492 = vst [vmem:[#allocation2] sm:$0xff] %v484
    %493 = vst [vmem:[#allocation2 + $0x8] sm:$0xff] %v485
    %494 = vst [vmem:[#allocation2 + $0x10] sm:$0xff] %v486
    %495 = vst [vmem:[#allocation2 + $0x18] sm:$0xff] %v487
    %496 = vst [vmem:[#allocation2 + $0x20] sm:$0xff] %v488
    %497 = vst [vmem:[#allocation2 + $0x28] sm:$0xff] %v489
    %498 = vst [vmem:[#allocation2 + $0x30] sm:$0xff] %v490
    %499 = vst [vmem:[#allocation2 + $0x38] sm:$0xff] %v491
    %v500 = vld [vmem:[#allocation3] sm:$0xf]
    %v501 = vld [vmem:[#allocation3 + $0x4] sm:$0xf]
    %v502 = vld [vmem:[#allocation3 + $0x8] sm:$0xf]
    %v503 = vld [vmem:[#allocation3 + $0xc] sm:$0xf]
    %v504 = vld [vmem:[#allocation3 + $0x10] sm:$0xf]
    %v505 = vld [vmem:[#allocation3 + $0x14] sm:$0xf]
    %v506 = vld [vmem:[#allocation3 + $0x18] sm:$0xf]
    %v507 = vld [vmem:[#allocation3 + $0x1c] sm:$0xf]
    %v508 = vld [vmem:[#allocation3 + $0x20] sm:$0xf]
    %v509 = vld [vmem:[#allocation3 + $0x24] sm:$0xf]
    %v510 = vld [vmem:[#allocation3 + $0x28] sm:$0xf]
    %v511 = vld [vmem:[#allocation3 + $0x2c] sm:$0xf]
    %v512 = vld [vmem:[#allocation3 + $0x30] sm:$0xf]
    %v513 = vld [vmem:[#allocation3 + $0x34] sm:$0xf]
    %v514 = vld [vmem:[#allocation3 + $0x38] sm:$0xf]
    %v515 = vld [vmem:[#allocation3 + $0x3c] sm:$0xf]
    %v516 = vld [vmem:[#allocation2] sm:$0xff]
    %v517 = vld [vmem:[#allocation2 + $0x8] sm:$0xff]
    %v518 = vld [vmem:[#allocation2 + $0x10] sm:$0xff]
    %v519 = vld [vmem:[#allocation2 + $0x18] sm:$0xff]
    %v520 = vld [vmem:[#allocation2 + $0x20] sm:$0xff]
    %v521 = vld [vmem:[#allocation2 + $0x28] sm:$0xff]
    %v522 = vld [vmem:[#allocation2 + $0x30] sm:$0xff]
    %v523 = vld [vmem:[#allocation2 + $0x38] sm:$0xff]
    %v540 = vunpack.c.l.b16 %v500
    %v541 = vunpack.c.l.b16 %v501
    %v542 = vunpack.c.l.b16 %v502
    %v543 = vunpack.c.l.b16 %v503
    %v544 = vunpack.c.l.b16 %v504
    %v545 = vunpack.c.l.b16 %v505
    %v546 = vunpack.c.l.b16 %v506
    %v547 = vunpack.c.l.b16 %v507
    %v548 = vunpack.c.l.b16 %v508
    %v549 = vunpack.c.l.b16 %v509
    %v550 = vunpack.c.l.b16 %v510
    %v551 = vunpack.c.l.b16 %v511
    %v552 = vunpack.c.l.b16 %v512
    %v553 = vunpack.c.l.b16 %v513
    %v554 = vunpack.c.l.b16 %v514
    %v555 = vunpack.c.l.b16 %v515
    %v556 = vpack.c.b16 %v541, %v540
    %v557 = vpack.c.b16 %v543, %v542
    %v558 = vpack.c.b16 %v545, %v544
    %v559 = vpack.c.b16 %v547, %v546
    %v560 = vpack.c.b16 %v549, %v548
    %v561 = vpack.c.b16 %v551, %v550
    %v562 = vpack.c.b16 %v553, %v552
    %v563 = vpack.c.b16 %v555, %v554
    %572 = vmatprep.subr.bf16.mxu0 0
    %573 = vmatpush1.bf16.msra.mxu0 %v516
    %574 = vmatprep.subr.bf16.mxu0 0
    %575 = vmatpush1.bf16.msra.mxu0 %v517
    %576 = vmatprep.subr.bf16.mxu0 0
    %577 = vmatpush1.bf16.msra.mxu0 %v518
    %578 = vmatprep.subr.bf16.mxu0 0
    %579 = vmatpush1.bf16.msra.mxu0 %v519
    %580 = vmatprep.subr.bf16.mxu0 0
    %581 = vmatpush1.bf16.msra.mxu0 %v520
    %582 = vmatprep.subr.bf16.mxu0 0
    %583 = vmatpush1.bf16.msra.mxu0 %v521
    %584 = vmatprep.subr.bf16.mxu0 0
    %585 = vmatpush1.bf16.msra.mxu0 %v522
    %586 = vmatprep.subr.bf16.mxu0 0
    %587 = vmatpush1.bf16.msra.mxu0 %v523
    %588 = vmatprep.subr.bf16.mxu0 0
    %589 = vmatpush1.bf16.msra.mxu0 0
    %590 = vmatprep.subr.bf16.mxu0 0
    %591 = vmatpush1.bf16.msra.mxu0 0
    %592 = vmatprep.subr.bf16.mxu0 0
    %593 = vmatpush1.bf16.msra.mxu0 0
    %594 = vmatprep.subr.bf16.mxu0 0
    %595 = vmatpush1.bf16.msra.mxu0 0
    %596 = vmatprep.subr.bf16.mxu0 0
    %597 = vmatpush1.bf16.msra.mxu0 0
    %598 = vmatprep.subr.bf16.mxu0 0
    %599 = vmatpush1.bf16.msra.mxu0 0
    %600 = vmatprep.subr.bf16.mxu0 0
    %601 = vmatpush1.bf16.msra.mxu0 0
    %602 = vmatprep.subr.bf16.mxu0 0
    %603 = vmatpush1.bf16.msra.mxu0 0
    %604 = vmatprep.mubr.bf16.mxu0 0
    %605 = vmatmul.mubr.bf16.gmra.mrb[0].mxu0 %v556
    %v606 = vpop.f32.mrb[0].mxu0
    %v607 = vadd.f32 0.0, %v606
    %v608 = vpop.f32.mrb[0].mxu0
    %v609 = vpop.f32.mrb[0].mxu0
    %v610 = vadd.f32 0.0, %v609
    %v611 = vpop.f32.mrb[0].mxu0
    %612 = vmatprep.mubr.bf16.mxu0 0
    %613 = vmatmul.mubr.bf16.gmra.mrb[0].mxu0 %v557
    %v614 = vpop.f32.mrb[0].mxu0
    %v615 = vadd.f32 0.0, %v614
    %v616 = vpop.f32.mrb[0].mxu0
    %v617 = vpop.f32.mrb[0].mxu0
    %v618 = vadd.f32 0.0, %v617
    %v619 = vpop.f32.mrb[0].mxu0
    %620 = vmatprep.mubr.bf16.mxu0 0
    %621 = vmatmul.mubr.bf16.gmra.mrb[0].mxu0 %v558
    %v622 = vpop.f32.mrb[0].mxu0
    %v623 = vadd.f32 0.0, %v622
    %v624 = vpop.f32.mrb[0].mxu0
    %v625 = vpop.f32.mrb[0].mxu0
    %v626 = vadd.f32 0.0, %v625
    %v627 = vpop.f32.mrb[0].mxu0
    %628 = vmatprep.mubr.bf16.mxu0 0
    %629 = vmatmul.mubr.bf16.gmra.mrb[0].mxu0 %v559
    %v630 = vpop.f32.mrb[0].mxu0
    %v631 = vadd.f32 0.0, %v630
    %v632 = vpop.f32.mrb[0].mxu0
    %v633 = vpop.f32.mrb[0].mxu0
    %v634 = vadd.f32 0.0, %v633
    %v635 = vpop.f32.mrb[0].mxu0
    %636 = vmatprep.mubr.bf16.mxu0 0
    %637 = vmatmul.mubr.bf16.gmra.mrb[0].mxu0 %v560
    %v638 = vpop.f32.mrb[0].mxu0
    %v639 = vadd.f32 0.0, %v638
    %v640 = vpop.f32.mrb[0].mxu0
    %v641 = vpop.f32.mrb[0].mxu0
    %v642 = vadd.f32 0.0, %v641
    %v643 = vpop.f32.mrb[0].mxu0
    %644 = vmatprep.mubr.bf16.mxu0 0
    %645 = vmatmul.mubr.bf16.gmra.mrb[0].mxu0 %v561
    %v646 = vpop.f32.mrb[0].mxu0
    %v647 = vadd.f32 0.0, %v646
    %v648 = vpop.f32.mrb[0].mxu0
    %v649 = vpop.f32.mrb[0].mxu0
    %v650 = vadd.f32 0.0, %v649
    %v651 = vpop.f32.mrb[0].mxu0
    %652 = vmatprep.mubr.bf16.mxu0 0
    %653 = vmatmul.mubr.bf16.gmra.mrb[0].mxu0 %v562
    %v654 = vpop.f32.mrb[0].mxu0
    %v655 = vadd.f32 0.0, %v654
    %v656 = vpop.f32.mrb[0].mxu0
    %v657 = vpop.f32.mrb[0].mxu0
    %v658 = vadd.f32 0.0, %v657
    %v659 = vpop.f32.mrb[0].mxu0
    %660 = vmatprep.mubr.bf16.mxu0 0
    %661 = vmatmul.mubr.bf16.gmra.mrb[0].mxu0 %v563
    %v662 = vpop.f32.mrb[0].mxu0
    %v663 = vadd.f32 0.0, %v662
    %v664 = vpop.f32.mrb[0].mxu0
    %v665 = vpop.f32.mrb[0].mxu0
    %v666 = vadd.f32 0.0, %v665
    %v667 = vpop.f32.mrb[0].mxu0
    %668 = vdwg.mxu0
    %v669 = vpack.c.bf16 %v610, %v607
    %v670 = vpack.c.bf16 %v618, %v615
    %v671 = vpack.c.bf16 %v626, %v623
    %v672 = vpack.c.bf16 %v634, %v631
    %v673 = vpack.c.bf16 %v642, %v639
    %v674 = vpack.c.bf16 %v650, %v647
    %v675 = vpack.c.bf16 %v658, %v655
    %v676 = vpack.c.bf16 %v666, %v663
    %677 = vst [vmem:[#allocation2] sm:$0xff] %v669
    %678 = vst [vmem:[#allocation2 + $0x8] sm:$0xff] %v670
    %679 = vst [vmem:[#allocation2 + $0x10] sm:$0xff] %v671
    %680 = vst [vmem:[#allocation2 + $0x18] sm:$0xff] %v672
    %681 = vst [vmem:[#allocation2 + $0x20] sm:$0xff] %v673
    %682 = vst [vmem:[#allocation2 + $0x28] sm:$0xff] %v674
    %683 = vst [vmem:[#allocation2 + $0x30] sm:$0xff] %v675
    %684 = vst [vmem:[#allocation2 + $0x38] sm:$0xff] %v676
    %v685 = vld [vmem:[#allocation9] sm:$0xf]
    %v686 = vld [vmem:[#allocation9 + $0x4] sm:$0xf]
    %v687 = vld [vmem:[#allocation9 + $0x8] sm:$0xf]
    %v688 = vld [vmem:[#allocation9 + $0xc] sm:$0xf]
    %v689 = vld [vmem:[#allocation9 + $0x10] sm:$0xf]
    %v690 = vld [vmem:[#allocation9 + $0x14] sm:$0xf]
    %v691 = vld [vmem:[#allocation9 + $0x18] sm:$0xf]
    %v692 = vld [vmem:[#allocation9 + $0x1c] sm:$0xf]
    %v693 = vld [vmem:[#allocation9 + $0x20] sm:$0xf]
    %v694 = vld [vmem:[#allocation9 + $0x24] sm:$0xf]
    %v695 = vld [vmem:[#allocation9 + $0x28] sm:$0xf]
    %v696 = vld [vmem:[#allocation9 + $0x2c] sm:$0xf]
    %v697 = vld [vmem:[#allocation9 + $0x30] sm:$0xf]
    %v698 = vld [vmem:[#allocation9 + $0x34] sm:$0xf]
    %v699 = vld [vmem:[#allocation9 + $0x38] sm:$0xf]
    %v700 = vld [vmem:[#allocation9 + $0x3c] sm:$0xf]
    %v701 = vld [vmem:[#allocation2] sm:$0xff]
    %v702 = vld [vmem:[#allocation2 + $0x8] sm:$0xff]
    %v703 = vld [vmem:[#allocation2 + $0x10] sm:$0xff]
    %v704 = vld [vmem:[#allocation2 + $0x18] sm:$0xff]
    %v705 = vld [vmem:[#allocation2 + $0x20] sm:$0xff]
    %v706 = vld [vmem:[#allocation2 + $0x28] sm:$0xff]
    %v707 = vld [vmem:[#allocation2 + $0x30] sm:$0xff]
    %v708 = vld [vmem:[#allocation2 + $0x38] sm:$0xff]
    %v725 = vunpack.c.l.b16 %v685
    %v726 = vunpack.c.l.b16 %v686
    %v727 = vunpack.c.l.b16 %v687
    %v728 = vunpack.c.l.b16 %v688
    %v729 = vunpack.c.l.b16 %v689
    %v730 = vunpack.c.l.b16 %v690
    %v731 = vunpack.c.l.b16 %v691
    %v732 = vunpack.c.l.b16 %v692
    %v733 = vunpack.c.l.b16 %v693
    %v734 = vunpack.c.l.b16 %v694
    %v735 = vunpack.c.l.b16 %v695
    %v736 = vunpack.c.l.b16 %v696
    %v737 = vunpack.c.l.b16 %v697
    %v738 = vunpack.c.l.b16 %v698
    %v739 = vunpack.c.l.b16 %v699
    %v740 = vunpack.c.l.b16 %v700
    %v741 = vpack.c.b16 %v726, %v725
    %v742 = vpack.c.b16 %v728, %v727
    %v743 = vpack.c.b16 %v730, %v729
    %v744 = vpack.c.b16 %v732, %v731
    %v745 = vpack.c.b16 %v734, %v733
    %v746 = vpack.c.b16 %v736, %v735
    %v747 = vpack.c.b16 %v738, %v737
    %v748 = vpack.c.b16 %v740, %v739
    %757 = vmatprep.subr.bf16.mxu0 0
    %758 = vmatpush1.bf16.msra.mxu0 %v701
    %759 = vmatprep.subr.bf16.mxu0 0
    %760 = vmatpush1.bf16.msra.mxu0 %v702
    %761 = vmatprep.subr.bf16.mxu0 0
    %762 = vmatpush1.bf16.msra.mxu0 %v703
    %763 = vmatprep.subr.bf16.mxu0 0
    %764 = vmatpush1.bf16.msra.mxu0 %v704
    %765 = vmatprep.subr.bf16.mxu0 0
    %766 = vmatpush1.bf16.msra.mxu0 %v705
    %767 = vmatprep.subr.bf16.mxu0 0
    %768 = vmatpush1.bf16.msra.mxu0 %v706
    %769 = vmatprep.subr.bf16.mxu0 0
    %770 = vmatpush1.bf16.msra.mxu0 %v707
    %771 = vmatprep.subr.bf16.mxu0 0
    %772 = vmatpush1.bf16.msra.mxu0 %v708
    %773 = vmatprep.subr.bf16.mxu0 0
    %774 = vmatpush1.bf16.msra.mxu0 0
    %775 = vmatprep.subr.bf16.mxu0 0
    %776 = vmatpush1.bf16.msra.mxu0 0
    %777 = vmatprep.subr.bf16.mxu0 0
    %778 = vmatpush1.bf16.msra.mxu0 0
    %779 = vmatprep.subr.bf16.mxu0 0
    %780 = vmatpush1.bf16.msra.mxu0 0
    %781 = vmatprep.subr.bf16.mxu0 0
    %782 = vmatpush1.bf16.msra.mxu0 0
    %783 = vmatprep.subr.bf16.mxu0 0
    %784 = vmatpush1.bf16.msra.mxu0 0
    %785 = vmatprep.subr.bf16.mxu0 0
    %786 = vmatpush1.bf16.msra.mxu0 0
    %787 = vmatprep.subr.bf16.mxu0 0
    %788 = vmatpush1.bf16.msra.mxu0 0
    %789 = vmatprep.mubr.bf16.mxu0 0
    %790 = vmatmul.mubr.bf16.gmra.mrb[0].mxu0 %v741
    %v791 = vpop.f32.mrb[0].mxu0
    %v792 = vadd.f32 0.0, %v791
    %v793 = vpop.f32.mrb[0].mxu0
    %v794 = vpop.f32.mrb[0].mxu0
    %v795 = vadd.f32 0.0, %v794
    %v796 = vpop.f32.mrb[0].mxu0
    %797 = vmatprep.mubr.bf16.mxu0 0
    %798 = vmatmul.mubr.bf16.gmra.mrb[0].mxu0 %v742
    %v799 = vpop.f32.mrb[0].mxu0
    %v800 = vadd.f32 0.0, %v799
    %v801 = vpop.f32.mrb[0].mxu0
    %v802 = vpop.f32.mrb[0].mxu0
    %v803 = vadd.f32 0.0, %v802
    %v804 = vpop.f32.mrb[0].mxu0
    %805 = vmatprep.mubr.bf16.mxu0 0
    %806 = vmatmul.mubr.bf16.gmra.mrb[0].mxu0 %v743
    %v807 = vpop.f32.mrb[0].mxu0
    %v808 = vadd.f32 0.0, %v807
    %v809 = vpop.f32.mrb[0].mxu0
    %v810 = vpop.f32.mrb[0].mxu0
    %v811 = vadd.f32 0.0, %v810
    %v812 = vpop.f32.mrb[0].mxu0
    %813 = vmatprep.mubr.bf16.mxu0 0
    %814 = vmatmul.mubr.bf16.gmra.mrb[0].mxu0 %v744
    %v815 = vpop.f32.mrb[0].mxu0
    %v816 = vadd.f32 0.0, %v815
    %v817 = vpop.f32.mrb[0].mxu0
    %v818 = vpop.f32.mrb[0].mxu0
    %v819 = vadd.f32 0.0, %v818
    %v820 = vpop.f32.mrb[0].mxu0
    %821 = vmatprep.mubr.bf16.mxu0 0
    %822 = vmatmul.mubr.bf16.gmra.mrb[0].mxu0 %v745
    %v823 = vpop.f32.mrb[0].mxu0
    %v824 = vadd.f32 0.0, %v823
    %v825 = vpop.f32.mrb[0].mxu0
    %v826 = vpop.f32.mrb[0].mxu0
    %v827 = vadd.f32 0.0, %v826
    %v828 = vpop.f32.mrb[0].mxu0
    %829 = vmatprep.mubr.bf16.mxu0 0
    %830 = vmatmul.mubr.bf16.gmra.mrb[0].mxu0 %v746
    %v831 = vpop.f32.mrb[0].mxu0
    %v832 = vadd.f32 0.0, %v831
    %v833 = vpop.f32.mrb[0].mxu0
    %v834 = vpop.f32.mrb[0].mxu0
    %v835 = vadd.f32 0.0, %v834
    %v836 = vpop.f32.mrb[0].mxu0
    %837 = vmatprep.mubr.bf16.mxu0 0
    %838 = vmatmul.mubr.bf16.gmra.mrb[0].mxu0 %v747
    %v839 = vpop.f32.mrb[0].mxu0
    %v840 = vadd.f32 0.0, %v839
    %v841 = vpop.f32.mrb[0].mxu0
    %v842 = vpop.f32.mrb[0].mxu0
    %v843 = vadd.f32 0.0, %v842
    %v844 = vpop.f32.mrb[0].mxu0
    %845 = vmatprep.mubr.bf16.mxu0 0
    %846 = vmatmul.mubr.bf16.gmra.mrb[0].mxu0 %v748
    %v847 = vpop.f32.mrb[0].mxu0
    %v848 = vadd.f32 0.0, %v847
    %v849 = vpop.f32.mrb[0].mxu0
    %v850 = vpop.f32.mrb[0].mxu0
    %v851 = vadd.f32 0.0, %v850
    %v852 = vpop.f32.mrb[0].mxu0
    %853 = vdwg.mxu0
    %854 = vst [vmem:[#allocation11] sm:$0xff] %v792
    %855 = vst [vmem:[#allocation11 + $0x8] sm:$0xff] %v795
    %856 = vst [vmem:[#allocation11 + $0x10] sm:$0xff] %v800
    %857 = vst [vmem:[#allocation11 + $0x18] sm:$0xff] %v803
    %858 = vst [vmem:[#allocation11 + $0x20] sm:$0xff] %v808
    %859 = vst [vmem:[#allocation11 + $0x28] sm:$0xff] %v811
    %860 = vst [vmem:[#allocation11 + $0x30] sm:$0xff] %v816
    %861 = vst [vmem:[#allocation11 + $0x38] sm:$0xff] %v819
    %862 = vst [vmem:[#allocation11 + $0x40] sm:$0xff] %v824
    %863 = vst [vmem:[#allocation11 + $0x48] sm:$0xff] %v827
    %864 = vst [vmem:[#allocation11 + $0x50] sm:$0xff] %v832
    %865 = vst [vmem:[#allocation11 + $0x58] sm:$0xff] %v835
    %866 = vst [vmem:[#allocation11 + $0x60] sm:$0xff] %v840
    %867 = vst [vmem:[#allocation11 + $0x68] sm:$0xff] %v843
    %868 = vst [vmem:[#allocation11 + $0x70] sm:$0xff] %v848
    %869 = vst [vmem:[#allocation11 + $0x78] sm:$0xff] %v851
    // Predicated region
    $region34: #{tpu_custom_call.1} parent=1 // pred_check
      _
    $region35: #{tpu_custom_call.1} parent=1 // pred_check_branch
      %871 = sbr.rel (0) target = $region37
    $region36: #{tpu_custom_call.1} parent=1 // pred_region
      %s873 = ssub.s32 2048, 2048
      %874 = vsyncadd [#allocation5], %s873
      %s875 = sshll.u32 [#allocation11], 4
      %s876 = int_to_ptr.vmem [resolvable:$true] %s875
      %881 = dma.vmem_to_hbm [thread:$0]  %s876, 2048, %s4, [#allocation5], 128, 128, 8
    $region37: #{tpu_custom_call.1} parent=1 // pred_fallthru
      _
    // Predicated region
    $region38: #{tpu_custom_call.1} parent=1 // pred_check
      _
    $region39: #{tpu_custom_call.1} parent=1 // pred_check_branch
      %883 = sbr.rel (0) target = $region41
    $region40: #{tpu_custom_call.1} parent=1 // pred_region
      %884 = dma.done [#allocation5], 2048
    $region41: #{tpu_custom_call.1} parent=1 // pred_fallthru
      _
    %885 = vsyncpa [#allocation4], 1
    %886 = vsyncpa [#allocation7], 1
    %887 = vsyncpa [#allocation10], 1
    %888 = vsyncpa [#allocation5], 1

</llo_original>
